<compile_context>
chip_gen: v7x
topology: tpu7x:2x2x1
jax: 0.10.0
libtpu: 0.0.40
codegen_flags: <defaults>
</compile_context>

<pallas_src>
import jax
import jax.numpy as jnp
from jax.experimental import pallas as pl
from jax.experimental.pallas import tpu as pltpu


def _round_up(x, m):
    return ((x + m - 1) // m) * m


def _cdiv(a, b):
    return -(-a // b)


# --------------------------------------------------------------------------
# Kernel: one batch element x one N-tile.
#   x_ref:     (C, TN) f32    seed features tile (cast to bf16 in-kernel)
#   w1_ref:    (C, C)  bf16   conv1 weight
#   b1_ref:    (C, 1)  f32
#   w2_ref:    (D, C)  bf16   conv2 weight
#   b2_ref:    (D, 1)  f32
#   score_ref: (D, TN) out    conv2 output (pre-transpose direction scores)
#   res_ref:   (C, TN) out    relu(conv1(x)) in final (B, C, N) layout
# --------------------------------------------------------------------------
def _lgd_kernel(x_ref, w1_ref, b1_ref, w2_ref, b2_ref, score_ref, res_ref):
    x = x_ref[...].astype(w1_ref.dtype)                   # f32 -> bf16 in-kernel

    # conv1 (1x1 Conv1d) + ReLU, f32 accumulation on the MXU.
    h = jnp.dot(w1_ref[...], x,
                preferred_element_type=jnp.float32) + b1_ref[...]   # (C, TN)
    h = jnp.maximum(h, 0.0)
    res_ref[...] = h.astype(res_ref.dtype)

    # conv2 (1x1 Conv1d) -> direction scores, kept channel-major (D, TN).
    f = jnp.dot(w2_ref[...], h.astype(w2_ref.dtype),
                preferred_element_type=jnp.float32) + b2_ref[...]   # (D, TN)
    score_ref[...] = f.astype(score_ref.dtype)


def _choose_tile_n(N, B, cap=8192):
    """Pick a multiple-of-128 tile over N.

    - capped at `cap` columns (per-block VMEM stays tiny, fewer grid steps)
    - when B == 1, force >= 2 tiles (if N allows) so v7x's two TensorCores
      both get work on the "parallel" grid axes
    - tile chosen as the smallest multiple of 128 covering N with the needed
      number of tiles, to minimize dead padded columns.
    """
    n128 = _round_up(N, 128)
    num_tiles = max(1, _cdiv(n128, cap))
    if B == 1 and num_tiles == 1 and n128 >= 256:
        num_tiles = 2
    return _round_up(_cdiv(n128, num_tiles), 128)


def _lgd_reference(seed_features, w1, b1, w2, b2):
    """Pure-JAX f32 reference (also the small-shape fallback path)."""
    h = jnp.einsum("ck,bkn->bcn", w1, seed_features) + b1[None, :, None]
    h = jnp.maximum(h, 0.0)
    f = jnp.einsum("dc,bcn->bdn", w2, h) + b2[None, :, None]
    return jnp.transpose(f, (0, 2, 1)), h                  # (B,N,D), (B,C,N)


def lgd_pallas(seed_features, w1, b1, w2, b2, *, mxu_dtype=jnp.bfloat16,
               out_dtype=jnp.float32, tile_cap=8192):
    """Fused LGD hot path (Pallas).

    Returns:
      direction_score: (B, N, D)  (== torch features.transpose(1, 2))
      res_features:    (B, C, N)  (== relu(conv1(x)))
    """
    B, C, N = seed_features.shape
    D = w2.shape[0]

    tile_n = _choose_tile_n(N, B, cap=tile_cap)
    n_pad = _round_up(N, tile_n)
    x = seed_features.astype(jnp.float32)
    if n_pad != N:
        x = jnp.pad(x, ((0, 0), (0, 0), (0, n_pad - N)))

    w1m = w1.astype(mxu_dtype)
    w2m = w2.astype(mxu_dtype)
    b1c = b1.reshape(C, 1).astype(jnp.float32)
    b2c = b2.reshape(D, 1).astype(jnp.float32)

    out_itm = jnp.dtype(out_dtype).itemsize
    w_itm = jnp.dtype(mxu_dtype).itemsize
    cost = pl.CostEstimate(
        flops=2 * B * n_pad * C * (C + D),
        transcendentals=0,
        bytes_accessed=(B * C * n_pad * 4                   # x in (f32)
                        + (C * C + D * C) * w_itm           # weights
                        + (C + D) * 4                       # biases
                        + B * (C + D) * n_pad * out_itm),   # outputs
    )

    grid = (B, n_pad // tile_n)
    score_raw, res_raw = pl.pallas_call(
        _lgd_kernel,
        out_shape=(
            jax.ShapeDtypeStruct((B, D, n_pad), out_dtype),   # scores (B,D,N)
            jax.ShapeDtypeStruct((B, C, n_pad), out_dtype),   # res    (B,C,N)
        ),
        grid_spec=pltpu.PrefetchScalarGridSpec(
            num_scalar_prefetch=0,
            grid=grid,
            in_specs=[
                # leading batch dim squeezed -> kernel sees (C, tile_n)
                pl.BlockSpec((None, C, tile_n), lambda b, n: (b, 0, n)),
                pl.BlockSpec((C, C), lambda b, n: (0, 0)),
                pl.BlockSpec((C, 1), lambda b, n: (0, 0)),
                pl.BlockSpec((D, C), lambda b, n: (0, 0)),
                pl.BlockSpec((D, 1), lambda b, n: (0, 0)),
            ],
            out_specs=[
                pl.BlockSpec((None, D, tile_n), lambda b, n: (b, 0, n)),
                pl.BlockSpec((None, C, tile_n), lambda b, n: (b, 0, n)),
            ],
        ),
        compiler_params=pltpu.CompilerParams(
            dimension_semantics=("parallel", "parallel")),
        cost_estimate=cost,
    )(x, w1m, b1c, w2m, b2c)

    # Only the tiny D-axis transpose + pad-slice happen outside the kernel.
    direction_score = jnp.transpose(score_raw[:, :, :N], (0, 2, 1))  # (B,N,D)
    res_features = res_raw[:, :, :N]                                 # (B,C,N)
    return direction_score.astype(jnp.float32), res_features.astype(jnp.float32)


def lgd_heads(seed_features, w1, b1, w2, b2, *, force_pallas=False, **kw):
    """Dispatch: tiny problems go to a fused XLA path, big ones to Pallas."""
    B, _, N = seed_features.shape
    if not force_pallas and B * N < 8192:
        return _lgd_reference(seed_features, w1, b1, w2, b2)
    return lgd_pallas(seed_features, w1, b1, w2, b2, **kw)


def lgd_forward(seed_features, end_points, params, key, is_training=True,
                force_pallas=False):
    """Mirrors LGD.forward. Returns (end_points, res_features)."""
    direction_score, res_features = lgd_heads(
        seed_features, params["w1"], params["b1"], params["w2"], params["b2"],
        force_pallas=force_pallas)

    end_points = dict(end_points)
    end_points["direction_score"] = direction_score

    if is_training:
        # min/max normalization + torch.multinomial(., 1): elementwise glue
        # in plain JAX (fused by XLA with the categorical sampling).
        ds = jax.lax.stop_gradient(direction_score)
        ds_max = jnp.max(ds, axis=-1, keepdims=True)
        ds_min = jnp.min(ds, axis=-1, keepdims=True)
        norm = (ds - ds_min) / (ds_max - ds_min + 1e-8)
        # log(weights) -> categorical == multinomial(weights, 1).  Rows where
        # all directions are equal would give all -inf logits; fall back to
        # uniform there (torch.multinomial would raise on that row).
        logits = jnp.where(ds_max > ds_min, jnp.log(norm), 0.0)
        top_direction_inds = jax.random.categorical(key, logits, axis=-1)
    else:
        top_direction_inds = jnp.argmax(direction_score, axis=-1)
        # TODO(synk): eval branch needs generate_grasp_directions /
        # batch_directionpoint_params_to_matrix (not defined in the reference
        # snippet), so grasp_top_direction_xyz / _rot are omitted.

    end_points["grasp_top_direction_inds"] = top_direction_inds
    return end_points, res_features


def init_params(key, feat_channel, num_direction):
    k1, k2, k3, k4 = jax.random.split(key, 4)
    s1 = 1.0 / (feat_channel ** 0.5)
    w1 = jax.random.uniform(k1, (feat_channel, feat_channel), jnp.float32, -s1, s1)
    b1 = jax.random.uniform(k2, (feat_channel,), jnp.float32, -s1, s1)
    w2 = jax.random.uniform(k3, (num_direction, feat_channel), jnp.float32, -s1, s1)
    b2 = jax.random.uniform(k4, (num_direction,), jnp.float32, -s1, s1)
    return {"w1": w1, "b1": b1, "w2": w2, "b2": b2}


if __name__ == "__main__":
    B, feat_channel, num_seed, num_direction = 2, 32, 128, 8

    root = jax.random.PRNGKey(0)
    k_param, k_input, k_sample = jax.random.split(root, 3)

    params = init_params(k_param, feat_channel, num_direction)
    seed_features = jax.random.normal(
        k_input, (B, feat_channel, num_seed), dtype=jnp.float32)

    # Run the Pallas kernel directly (forced so the small demo shape uses it)
    # and validate against the pure-JAX f32 reference.
    ds_pal, res_pal = lgd_heads(
        seed_features, params["w1"], params["b1"], params["w2"], params["b2"],
        force_pallas=True)
    ds_ref, res_ref = _lgd_reference(
        seed_features, params["w1"], params["b1"], params["w2"], params["b2"])
    jax.block_until_ready(ds_pal)
    jax.block_until_ready(res_pal)

    err_ds = float(jnp.max(jnp.abs(ds_pal - ds_ref)))
    err_res = float(jnp.max(jnp.abs(res_pal - res_ref)))
    assert err_ds < 0.05 and err_res < 0.05, (err_ds, err_res)

    # Full forward (training branch, multinomial sampling).
    end_points, res_features = lgd_forward(
        seed_features, {}, params, k_sample, is_training=True,
        force_pallas=True)

    jax.block_until_ready(res_features)
    jax.block_until_ready(end_points["direction_score"])
    jax.block_until_ready(end_points["grasp_top_direction_inds"])

    assert end_points["direction_score"].shape == (B, num_seed, num_direction)
    assert res_features.shape == (B, feat_channel, num_seed)
    assert end_points["grasp_top_direction_inds"].shape == (B, num_seed)

    print("KERNEL_OK")
</pallas_src>

<mosaic_0001>
module attributes {stable_mosaic.version = 11 : i64} {
  func.func @_lgd_kernel(%arg0: i32, %arg1: i32, %arg2: memref<1x32x128xf32, #tpu.memory_space<vmem>>, %arg3: memref<32x32xbf16, #tpu.memory_space<vmem>>, %arg4: memref<32x1xf32, #tpu.memory_space<vmem>>, %arg5: memref<8x32xbf16, #tpu.memory_space<vmem>>, %arg6: memref<8x1xf32, #tpu.memory_space<vmem>>, %arg7: memref<1x8x128xf32, #tpu.memory_space<vmem>>, %arg8: memref<1x32x128xf32, #tpu.memory_space<vmem>>) attributes {dimension_semantics = [#tpu.dimension_semantics<parallel>, #tpu.dimension_semantics<parallel>], iteration_bounds = array<i64: 2, 1>, scalar_prefetch = 0 : i64, scratch_operands = 0 : i64, tpu.core_type = #tpu.core_type<tc>, window_params = [{transform_indices = @transform_0, window_bounds = array<i64: 1, 32, 128>}, {pipeline_mode = #tpu.pipeline_mode<synchronous>, transform_indices = @transform_1, window_bounds = array<i64: 32, 32>}, {pipeline_mode = #tpu.pipeline_mode<synchronous>, transform_indices = @transform_2, window_bounds = array<i64: 32, 1>}, {pipeline_mode = #tpu.pipeline_mode<synchronous>, transform_indices = @transform_3, window_bounds = array<i64: 8, 32>}, {pipeline_mode = #tpu.pipeline_mode<synchronous>, transform_indices = @transform_4, window_bounds = array<i64: 8, 1>}, {transform_indices = @transform_5, window_bounds = array<i64: 1, 8, 128>}, {transform_indices = @transform_6, window_bounds = array<i64: 1, 32, 128>}]} {
    %c0 = arith.constant 0 : index
    %c0_0 = arith.constant 0 : index
    %c0_1 = arith.constant 0 : index
    %0 = vector.load %arg2[%c0, %c0_0, %c0_1] : memref<1x32x128xf32, #tpu.memory_space<vmem>>, vector<1x32x128xf32>
    %1 = vector.shape_cast %0 : vector<1x32x128xf32> to vector<32x128xf32>
    %2 = arith.truncf %1 : vector<32x128xf32> to vector<32x128xbf16>
    %c0_2 = arith.constant 0 : index
    %c0_3 = arith.constant 0 : index
    %3 = vector.load %arg3[%c0_2, %c0_3] : memref<32x32xbf16, #tpu.memory_space<vmem>>, vector<32x32xbf16>
    %cst = arith.constant dense<0.000000e+00> : vector<32x128xf32>
    %4 = tpu.matmul %3, %2, %cst {dimension_numbers = #tpu.dot_dimension_numbers<[1], [0], [0], [1], [0, 0, 1, 1], [], []>} : vector<32x32xbf16>, vector<32x128xbf16>, vector<32x128xf32> -> vector<32x128xf32>
    %c0_4 = arith.constant 0 : index
    %c0_5 = arith.constant 0 : index
    %5 = vector.load %arg4[%c0_4, %c0_5] : memref<32x1xf32, #tpu.memory_space<vmem>>, vector<32x1xf32>
    %6 = vector.broadcast %5 : vector<32x1xf32> to vector<32x128xf32>
    %7 = arith.addf %4, %6 : vector<32x128xf32>
    %cst_6 = arith.constant 0.000000e+00 : f32
    %8 = vector.broadcast %cst_6 : f32 to vector<32x128xf32>
    %9 = arith.maximumf %7, %8 : vector<32x128xf32>
    %c0_7 = arith.constant 0 : index
    %c0_8 = arith.constant 0 : index
    %c0_9 = arith.constant 0 : index
    %10 = vector.load %arg8[%c0_7, %c0_8, %c0_9] : memref<1x32x128xf32, #tpu.memory_space<vmem>>, vector<1x32x128xf32>
    %11 = vector.shape_cast %10 : vector<1x32x128xf32> to vector<32x128xf32>
    %12 = vector.shape_cast %9 : vector<32x128xf32> to vector<1x32x128xf32>
    tpu.vector_store %arg8[%c0_7, %c0_8, %c0_9], %12 {strides = array<i32>} : memref<1x32x128xf32, #tpu.memory_space<vmem>>, vector<1x32x128xf32>,
    %c0_10 = arith.constant 0 : index
    %c0_11 = arith.constant 0 : index
    %13 = vector.load %arg5[%c0_10, %c0_11] : memref<8x32xbf16, #tpu.memory_space<vmem>>, vector<8x32xbf16>
    %14 = arith.truncf %9 : vector<32x128xf32> to vector<32x128xbf16>
    %cst_12 = arith.constant dense<0.000000e+00> : vector<8x128xf32>
    %15 = tpu.matmul %13, %14, %cst_12 {dimension_numbers = #tpu.dot_dimension_numbers<[1], [0], [0], [1], [0, 0, 1, 1], [], []>} : vector<8x32xbf16>, vector<32x128xbf16>, vector<8x128xf32> -> vector<8x128xf32>
    %c0_13 = arith.constant 0 : index
    %c0_14 = arith.constant 0 : index
    %16 = vector.load %arg6[%c0_13, %c0_14] : memref<8x1xf32, #tpu.memory_space<vmem>>, vector<8x1xf32>
    %17 = vector.broadcast %16 : vector<8x1xf32> to vector<8x128xf32>
    %18 = arith.addf %15, %17 : vector<8x128xf32>
    %c0_15 = arith.constant 0 : index
    %c0_16 = arith.constant 0 : index
    %c0_17 = arith.constant 0 : index
    %19 = vector.load %arg7[%c0_15, %c0_16, %c0_17] : memref<1x8x128xf32, #tpu.memory_space<vmem>>, vector<1x8x128xf32>
    %20 = vector.shape_cast %19 : vector<1x8x128xf32> to vector<8x128xf32>
    %21 = vector.shape_cast %18 : vector<8x128xf32> to vector<1x8x128xf32>
    tpu.vector_store %arg7[%c0_15, %c0_16, %c0_17], %21 {strides = array<i32>} : memref<1x8x128xf32, #tpu.memory_space<vmem>>, vector<1x8x128xf32>,
    return
  }
  func.func @transform_0(%arg0: i32, %arg1: i32) -> (i32, i32, i32) {
    %c0_i32 = arith.constant 0 : i32
    %c0_i32_0 = arith.constant 0 : i32
    return %arg0, %c0_i32, %arg1 : i32, i32, i32
  }
  func.func @transform_1(%arg0: i32, %arg1: i32) -> (i32, i32) {
    %c0_i32 = arith.constant 0 : i32
    %c0_i32_0 = arith.constant 0 : i32
    %c0_i32_1 = arith.constant 0 : i32
    return %c0_i32, %c0_i32_0 : i32, i32
  }
  func.func @transform_2(%arg0: i32, %arg1: i32) -> (i32, i32) {
    %c0_i32 = arith.constant 0 : i32
    %c0_i32_0 = arith.constant 0 : i32
    %c0_i32_1 = arith.constant 0 : i32
    return %c0_i32, %c0_i32_0 : i32, i32
  }
  func.func @transform_3(%arg0: i32, %arg1: i32) -> (i32, i32) {
    %c0_i32 = arith.constant 0 : i32
    %c0_i32_0 = arith.constant 0 : i32
    %c0_i32_1 = arith.constant 0 : i32
    return %c0_i32, %c0_i32_0 : i32, i32
  }
  func.func @transform_4(%arg0: i32, %arg1: i32) -> (i32, i32) {
    %c0_i32 = arith.constant 0 : i32
    %c0_i32_0 = arith.constant 0 : i32
    %c0_i32_1 = arith.constant 0 : i32
    return %c0_i32, %c0_i32_0 : i32, i32
  }
  func.func @transform_5(%arg0: i32, %arg1: i32) -> (i32, i32, i32) {
    %c0_i32 = arith.constant 0 : i32
    %c0_i32_0 = arith.constant 0 : i32
    return %arg0, %c0_i32, %arg1 : i32, i32, i32
  }
  func.func @transform_6(%arg0: i32, %arg1: i32) -> (i32, i32, i32) {
    %c0_i32 = arith.constant 0 : i32
    %c0_i32_0 = arith.constant 0 : i32
    return %arg0, %c0_i32, %arg1 : i32, i32, i32
  }
}

</mosaic_0001>

<llo_original>
// kernel: tpu_custom_call.1
$region0: #{tpu_custom_call.1}
  #allocation0 [shape = 'u32[]', space=smem, size = 0x4, offset = 0x4, fixed_abs, tag = 'smem constant byte address 0x4 - core index']
  #allocation1 [shape = 'u32[144,128]{1,0:T(1,128)}', space=vmem, size = 0x12000, scoped, tag = 'internal scratch']
  %s0 = inlined_call_operand.hbm [shape: f32[2,32,128], index: 0, kind: input, shape index: {}]
  %s1 = inlined_call_operand.vmem [shape: bf16[32,32], index: 1, kind: input, shape index: {}]
  %s2 = inlined_call_operand.vmem [shape: f32[32,1], index: 2, kind: input, shape index: {}]
  %s3 = inlined_call_operand.vmem [shape: bf16[8,32], index: 3, kind: input, shape index: {}]
  %s4 = inlined_call_operand.vmem [shape: f32[8,1], index: 4, kind: input, shape index: {}]
  %s5 = inlined_call_operand.hbm [shape: f32[2,8,128], index: 5, kind: output, shape index: {0}]
  %s6 = inlined_call_operand.hbm [shape: f32[2,32,128], index: 6, kind: output, shape index: {1}]
  %7 = xla_tuple %s5, %s6
  %s8 = sld [smem:[#allocation0]]
  $region65: #{tpu_custom_call.1} parent=0
    _
  %s10 = ssub.s32 1, %s8
  %s11 = scalar_select 0, %s10, %s8
  $region1: #{tpu_custom_call.1} parent=0
    #allocation2 [shape = 'u8[32768]{0}', space=vmem, size = 0x8000, scoped, tag = 'input window, operand 0']
    #allocation3 [shape = 's32[2]{0}', space=sflag, size = 0x8, scoped, tag = 'scoped memory for tpu_custom_call.1']
    #allocation4 [shape = 's32[2]{0}', space=sflag, size = 0x8, scoped, tag = 'scoped memory for tpu_custom_call.1']
    #allocation5 [shape = 'u8[8192]{0}', space=vmem, size = 0x2000, scoped, tag = 'output window, operand 0']
    #allocation6 [shape = 'u8[32768]{0}', space=vmem, size = 0x8000, scoped, tag = 'output window, operand 1']
    #allocation7 [shape = 's32[2]{0}', space=sflag, size = 0x8, scoped, tag = 'scoped memory for tpu_custom_call.1']
    %12 = vsyncpa [#allocation3], 0
    %s13 = scalar_lea.sflag [#allocation3], 1
    %14 = vsyncpa %s13, 0
    %15 = vsyncpa [#allocation4], 0
    %s16 = scalar_lea.sflag [#allocation4], 1
    %17 = vsyncpa %s16, 0
    %18 = vsyncpa [#allocation7], 0
    %s19 = scalar_lea.sflag [#allocation7], 1
    %20 = vsyncpa %s19, 0
    loop: start=0, step=1, limit=4
    $region2: #{tpu_custom_call.1} parent=1 // loop_pre_header
      _
    $region3: #{tpu_custom_call.1} parent=1 // loop_header
      %s22 = sphi 0, %s26
      %p23 = scmp.ge.s32.totalorder %s22, 4
      %s29 = sphi 0, %s41
      %s30 = sphi 0, %s37
      %s31 = sphi 0, %s29
      %s32 = sphi 0, %s30
      %s33 = sphi 0, %s31
      %s34 = sphi 0, %s32
      %s46 = sphi 0, %s48
      %s49 = sphi 0, %s46
      %s50 = sphi 0, %s49
      %s66 = sphi 0, %s50
      %s70 = sphi 0, %s70
      %s72 = sphi 0, %s70
      %s73 = sphi 0, %s72
      %s87 = sphi 0, %s73
      %s91 = sphi 0, %s91
      %s93 = sphi 0, %s91
      %s94 = sphi 0, %s93
      %s108 = sphi 0, %s94
      %s112 = sphi 0, %s112
      %s114 = sphi 0, %s112
      %s115 = sphi 0, %s114
      %s129 = sphi 0, %s115
      %s133 = sphi 0, %s133
      %s135 = sphi 0, %s133
      %s136 = sphi 0, %s135
      %s150 = sphi 0, %s136
      %s158 = sphi 0, %s160
      %s161 = sphi 0, %s158
      %s162 = sphi 0, %s161
      %s178 = sphi 0, %s162
      %s186 = sphi 0, %s188
      %s189 = sphi 0, %s186
      %s190 = sphi 0, %s189
      %s206 = sphi 0, %s190
    $region4: #{tpu_custom_call.1} parent=1 // loop_header_branch
      %25 = sbr.rel (%p23) target = $region8
    $region5: #{tpu_custom_call.1} parent=1 // loop_body
      %s27 = ssub.s32 %s22, 1
      %s28 = ssub.s32 %s22, 2
      %s35 = sadd.s32 1, %s30
      %p36 = scmp.ge.s32.totalorder %s35, 1
      %s37 = scalar_select %p36, 0, %s35
      %s38 = sadd.s32 1, %s29
      %s39 = scalar_select %p36, %s38, %s29
      %p40 = scmp.ge.s32.totalorder %s39, 2
      %s41 = scalar_select %p40, 0, %s39
      %s42 = ssub.s32 %s29, %s41
      %s43 = ssub.s32 %s30, %s37
      %s44 = sor.u32 %s42, %s43
      %p45 = scmp.eq.s32.totalorder %s44, 0
      %s47 = sadd.s32 %s46, 1
      %s48 = scalar_select %p45, %s46, %s47
      %p51 = pneg %p45
      %p52 = scmp.eq.s32.totalorder %s22, 1
      %p53 = por %p51, %p52
      %p54 = scmp.ne.s32.totalorder %s46, %s49
      %p55 = scmp.eq.s32.totalorder %s22, 0
      %p56 = por %p54, %p55
      %p57 = scmp.ne.s32.totalorder %s46, %s49
      %p58 = scmp.eq.s32.totalorder %s27, 1
      %p59 = por %p57, %p58
      %p60 = scmp.ne.s32.totalorder %s49, %s50
      %p61 = scmp.eq.s32.totalorder %s27, 0
      %p62 = por %p60, %p61
      %p63 = scmp.ne.s32.totalorder %s49, %s50
      %p64 = scmp.eq.s32.totalorder %s28, 1
      %p65 = por %p63, %p64
      %p67 = scmp.ne.s32.totalorder %s50, %s66
      %p68 = scmp.eq.s32.totalorder %s28, 0
      %p69 = por %p67, %p68
      %s71 = sadd.s32 %s70, 1
      %p74 = scmp.eq.s32.totalorder %s22, 1
      %p75 = scmp.ne.s32.totalorder %s70, %s72
      %p76 = scmp.eq.s32.totalorder %s22, 0
      %p77 = por %p75, %p76
      %p78 = scmp.ne.s32.totalorder %s70, %s72
      %p79 = scmp.eq.s32.totalorder %s27, 1
      %p80 = por %p78, %p79
      %p81 = scmp.ne.s32.totalorder %s72, %s73
      %p82 = scmp.eq.s32.totalorder %s27, 0
      %p83 = por %p81, %p82
      %p84 = scmp.ne.s32.totalorder %s72, %s73
      %p85 = scmp.eq.s32.totalorder %s28, 1
      %p86 = por %p84, %p85
      %p88 = scmp.ne.s32.totalorder %s73, %s87
      %p89 = scmp.eq.s32.totalorder %s28, 0
      %p90 = por %p88, %p89
      %s92 = sadd.s32 %s91, 1
      %p95 = scmp.eq.s32.totalorder %s22, 1
      %p96 = scmp.ne.s32.totalorder %s91, %s93
      %p97 = scmp.eq.s32.totalorder %s22, 0
      %p98 = por %p96, %p97
      %p99 = scmp.ne.s32.totalorder %s91, %s93
      %p100 = scmp.eq.s32.totalorder %s27, 1
      %p101 = por %p99, %p100
      %p102 = scmp.ne.s32.totalorder %s93, %s94
      %p103 = scmp.eq.s32.totalorder %s27, 0
      %p104 = por %p102, %p103
      %p105 = scmp.ne.s32.totalorder %s93, %s94
      %p106 = scmp.eq.s32.totalorder %s28, 1
      %p107 = por %p105, %p106
      %p109 = scmp.ne.s32.totalorder %s94, %s108
      %p110 = scmp.eq.s32.totalorder %s28, 0
      %p111 = por %p109, %p110
      %s113 = sadd.s32 %s112, 1
      %p116 = scmp.eq.s32.totalorder %s22, 1
      %p117 = scmp.ne.s32.totalorder %s112, %s114
      %p118 = scmp.eq.s32.totalorder %s22, 0
      %p119 = por %p117, %p118
      %p120 = scmp.ne.s32.totalorder %s112, %s114
      %p121 = scmp.eq.s32.totalorder %s27, 1
      %p122 = por %p120, %p121
      %p123 = scmp.ne.s32.totalorder %s114, %s115
      %p124 = scmp.eq.s32.totalorder %s27, 0
      %p125 = por %p123, %p124
      %p126 = scmp.ne.s32.totalorder %s114, %s115
      %p127 = scmp.eq.s32.totalorder %s28, 1
      %p128 = por %p126, %p127
      %p130 = scmp.ne.s32.totalorder %s115, %s129
      %p131 = scmp.eq.s32.totalorder %s28, 0
      %p132 = por %p130, %p131
      %s134 = sadd.s32 %s133, 1
      %p137 = scmp.eq.s32.totalorder %s22, 1
      %p138 = scmp.ne.s32.totalorder %s133, %s135
      %p139 = scmp.eq.s32.totalorder %s22, 0
      %p140 = por %p138, %p139
      %p141 = scmp.ne.s32.totalorder %s133, %s135
      %p142 = scmp.eq.s32.totalorder %s27, 1
      %p143 = por %p141, %p142
      %p144 = scmp.ne.s32.totalorder %s135, %s136
      %p145 = scmp.eq.s32.totalorder %s27, 0
      %p146 = por %p144, %p145
      %p147 = scmp.ne.s32.totalorder %s135, %s136
      %p148 = scmp.eq.s32.totalorder %s28, 1
      %p149 = por %p147, %p148
      %p151 = scmp.ne.s32.totalorder %s136, %s150
      %p152 = scmp.eq.s32.totalorder %s28, 0
      %p153 = por %p151, %p152
      %s154 = ssub.s32 %s29, %s41
      %s155 = ssub.s32 %s30, %s37
      %s156 = sor.u32 %s154, %s155
      %p157 = scmp.eq.s32.totalorder %s156, 0
      %s159 = sadd.s32 %s158, 1
      %s160 = scalar_select %p157, %s158, %s159
      %p163 = pneg %p157
      %p164 = scmp.eq.s32.totalorder %s22, 1
      %p165 = por %p163, %p164
      %p166 = scmp.ne.s32.totalorder %s158, %s161
      %p167 = scmp.eq.s32.totalorder %s22, 0
      %p168 = por %p166, %p167
      %p169 = scmp.ne.s32.totalorder %s158, %s161
      %p170 = scmp.eq.s32.totalorder %s27, 1
      %p171 = por %p169, %p170
      %p172 = scmp.ne.s32.totalorder %s161, %s162
      %p173 = scmp.eq.s32.totalorder %s27, 0
      %p174 = por %p172, %p173
      %p175 = scmp.ne.s32.totalorder %s161, %s162
      %p176 = scmp.eq.s32.totalorder %s28, 1
      %p177 = por %p175, %p176
      %p179 = scmp.ne.s32.totalorder %s162, %s178
      %p180 = scmp.eq.s32.totalorder %s28, 0
      %p181 = por %p179, %p180
      %s182 = ssub.s32 %s29, %s41
      %s183 = ssub.s32 %s30, %s37
      %s184 = sor.u32 %s182, %s183
      %p185 = scmp.eq.s32.totalorder %s184, 0
      %s187 = sadd.s32 %s186, 1
      %s188 = scalar_select %p185, %s186, %s187
      %p191 = pneg %p185
      %p192 = scmp.eq.s32.totalorder %s22, 1
      %p193 = por %p191, %p192
      %p194 = scmp.ne.s32.totalorder %s186, %s189
      %p195 = scmp.eq.s32.totalorder %s22, 0
      %p196 = por %p194, %p195
      %p197 = scmp.ne.s32.totalorder %s186, %s189
      %p198 = scmp.eq.s32.totalorder %s27, 1
      %p199 = por %p197, %p198
      %p200 = scmp.ne.s32.totalorder %s189, %s190
      %p201 = scmp.eq.s32.totalorder %s27, 0
      %p202 = por %p200, %p201
      %p203 = scmp.ne.s32.totalorder %s189, %s190
      %p204 = scmp.eq.s32.totalorder %s28, 1
      %p205 = por %p203, %p204
      %p207 = scmp.ne.s32.totalorder %s190, %s206
      %p208 = scmp.eq.s32.totalorder %s28, 0
      %p209 = por %p207, %p208
      %p210 = scmp.le.s32.totalorder 1, %s22
      %p211 = scmp.lt.s32.totalorder %s22, 3
      %p212 = pnand %p210, %p211
      %p213 = pneg %p212
      // Predicated region
      $region9: #{tpu_custom_call.1} parent=5 // pred_check
        _
      $region10: #{tpu_custom_call.1} parent=5 // pred_check_branch
        %215 = sbr.rel (%p212) target = $region12
      $region11: #{tpu_custom_call.1} parent=5 // pred_region
        %s216 = ssub.s32 %s22, 1
        // Predicated region
        $region13: #{tpu_custom_call.1} parent=11 // pred_check
          %p217 = pneg %p83
        $region14: #{tpu_custom_call.1} parent=11 // pred_check_branch
          %219 = sbr.rel (%p217) target = $region16
        $region15: #{tpu_custom_call.1} parent=11 // pred_region
          _
        $region16: #{tpu_custom_call.1} parent=11 // pred_fallthru
          _
        // Predicated region
        $region17: #{tpu_custom_call.1} parent=11 // pred_check
          %p220 = pneg %p104
        $region18: #{tpu_custom_call.1} parent=11 // pred_check_branch
          %222 = sbr.rel (%p220) target = $region20
        $region19: #{tpu_custom_call.1} parent=11 // pred_region
          _
        $region20: #{tpu_custom_call.1} parent=11 // pred_fallthru
          _
        // Predicated region
        $region21: #{tpu_custom_call.1} parent=11 // pred_check
          %p223 = pneg %p125
        $region22: #{tpu_custom_call.1} parent=11 // pred_check_branch
          %225 = sbr.rel (%p223) target = $region24
        $region23: #{tpu_custom_call.1} parent=11 // pred_region
          _
        $region24: #{tpu_custom_call.1} parent=11 // pred_fallthru
          _
        // Predicated region
        $region25: #{tpu_custom_call.1} parent=11 // pred_check
          %p226 = pneg %p146
        $region26: #{tpu_custom_call.1} parent=11 // pred_check_branch
          %228 = sbr.rel (%p226) target = $region28
        $region27: #{tpu_custom_call.1} parent=11 // pred_region
          _
        $region28: #{tpu_custom_call.1} parent=11 // pred_fallthru
          _
      $region12: #{tpu_custom_call.1} parent=5 // pred_fallthru
        _
      %p229 = scmp.lt.s32.totalorder %s22, 2
      // Predicated region
      $region29: #{tpu_custom_call.1} parent=5 // pred_check
        %p230 = pneg %p229
      $region30: #{tpu_custom_call.1} parent=5 // pred_check_branch
        %232 = sbr.rel (%p230) target = $region32
      $region31: #{tpu_custom_call.1} parent=5 // pred_region
        // Predicated region
        $region33: #{tpu_custom_call.1} parent=31 // pred_check
          %p233 = pneg %p56
        $region34: #{tpu_custom_call.1} parent=31 // pred_check_branch
          %235 = sbr.rel (%p233) target = $region36
        $region35: #{tpu_custom_call.1} parent=31 // pred_region
          %s236 = sand.u32 %s46, 1
          %s237 = scalar_lea.sflag [#allocation3], %s236
          %s238 = sand.u32 %s46, 1
          %s239 = smul.addr %s238, 32
          %s240 = scalar_lea.vmem [#allocation2], %s239
          %s242 = ssub.s32 512, 512
          %243 = vsyncadd %s237, %s242
          %s244 = smul.addr %s29, 4
          %s245 = sadd.s32 %s30, %s244
          %s246 = smul.addr %s245, 128
          %s247 = scalar_lea.hbm %s0, %s246
          %s248 = sshll.u32 %s240, 4
          %s249 = int_to_ptr.vmem [resolvable:$true] %s248
          %254 = dma.hbm_to_vmem [thread:$0]  %s247, 512, %s249, %s237, 128, 128, 8
        $region36: #{tpu_custom_call.1} parent=31 // pred_fallthru
          _
      $region32: #{tpu_custom_call.1} parent=5 // pred_fallthru
        _
      %p255 = scmp.le.s32.totalorder 1, %s22
      %p256 = scmp.lt.s32.totalorder %s22, 3
      %p257 = pnand %p255, %p256
      %p258 = pneg %p257
      // Predicated region
      $region37: #{tpu_custom_call.1} parent=5 // pred_check
        _
      $region38: #{tpu_custom_call.1} parent=5 // pred_check_branch
        %260 = sbr.rel (%p257) target = $region40
      $region39: #{tpu_custom_call.1} parent=5 // pred_region
        %s261 = ssub.s32 %s22, 1
        %s262 = sand.u32 %s49, 1
        %s263 = scalar_lea.sflag [#allocation3], %s262
        %s264 = sand.u32 %s49, 1
        %s265 = smul.addr %s264, 32
        %s266 = scalar_lea.vmem [#allocation2], %s265
        // Predicated region
        $region41: #{tpu_custom_call.1} parent=39 // pred_check
          %p267 = pneg %p62
        $region42: #{tpu_custom_call.1} parent=39 // pred_check_branch
          %269 = sbr.rel (%p267) target = $region44
        $region43: #{tpu_custom_call.1} parent=39 // pred_region
          %270 = dma.done %s263, 512
        $region44: #{tpu_custom_call.1} parent=39 // pred_fallthru
          _
        %s271 = sand.u32 %s49, 1
        %s272 = scalar_lea.sflag [#allocation3], %s271
        %s273 = sand.u32 %s49, 1
        %s274 = smul.addr %s273, 32
        %s275 = scalar_lea.vmem [#allocation2], %s274
        %p276 = pneg %p62
        %p277 = pneg %p59
        %p278 = pneg %p83
        %p279 = pneg %p80
        %p280 = pneg %p104
        %p281 = pneg %p101
        %p282 = pneg %p125
        %p283 = pneg %p122
        %p284 = pneg %p146
        %p285 = pneg %p143
        %p286 = pneg %p174
        %p287 = pneg %p171
        %s288 = sand.u32 %s161, 1
        %s289 = scalar_lea.sflag [#allocation4], %s288
        %s290 = sand.u32 %s161, 1
        %s291 = smul.addr %s290, 8
        %s292 = scalar_lea.vmem [#allocation5], %s291
        %p293 = pneg %p202
        %p294 = pneg %p199
        %s295 = sand.u32 %s189, 1
        %s296 = scalar_lea.sflag [#allocation7], %s295
        %s297 = sand.u32 %s189, 1
        %s298 = smul.addr %s297, 32
        %s299 = scalar_lea.vmem [#allocation6], %s298
        %v301 = vld [vmem:[%s266] sm:$0xff]
        %v302 = vld [vmem:[%s266 + $0x8] sm:$0xff]
        %v303 = vld [vmem:[%s266 + $0x10] sm:$0xff]
        %v304 = vld [vmem:[%s266 + $0x18] sm:$0xff]
        %v305 = vpack.c.bf16 %v302, %v301
        %v306 = vpack.c.bf16 %v304, %v303
        %v307 = vld [vmem:[%s1] sm:$0xf]
        %v308 = vld [vmem:[%s1 + $0x4] sm:$0xf]
        %v309 = vld [vmem:[%s1 + $0x8] sm:$0xf]
        %v310 = vld [vmem:[%s1 + $0xc] sm:$0xf]
        %v311 = vld [vmem:[%s2] sm:$0xff]
        %v312 = vld [vmem:[%s2 + $0x8] sm:$0xff]
        %v313 = vld [vmem:[%s2 + $0x10] sm:$0xff]
        %v314 = vld [vmem:[%s2 + $0x18] sm:$0xff]
        %316 = vset.pattern.permute.xlu0 0
        %317 = vperm.xlu0 %316, %v311
        %v318 = vpop.permute.xlu0 %317
        %321 = vset.pattern.permute.xlu0 0
        %322 = vperm.xlu0 %321, %v312
        %v323 = vpop.permute.xlu0 %322
        %326 = vset.pattern.permute.xlu0 0
        %327 = vperm.xlu0 %326, %v313
        %v328 = vpop.permute.xlu0 %327
        %331 = vset.pattern.permute.xlu0 0
        %332 = vperm.xlu0 %331, %v314
        %v333 = vpop.permute.xlu0 %332
        %v339 = vunpack.c.l.b16 %v307
        %v340 = vunpack.c.l.b16 %v308
        %v341 = vunpack.c.l.b16 %v309
        %v342 = vunpack.c.l.b16 %v310
        %v343 = vpack.c.b16 %v340, %v339
        %v344 = vpack.c.b16 %v342, %v341
        %vm345 = vcmask 261120
        %v347 = vsel %vm345, %v343, 0
        %v350 = vsel %vm345, %v344, 0
        %352 = vmatprep.subr.bf16.mxu0 0
        %353 = vmatpush1.bf16.msra.mxu0 %v305
        %354 = vmatprep.subr.bf16.mxu0 0
        %355 = vmatpush1.bf16.msra.mxu0 %v306
        %356 = vmatprep.subr.bf16.mxu0 0
        %357 = vmatpush1.bf16.msra.mxu0 0
        %358 = vmatprep.subr.bf16.mxu0 0
        %359 = vmatpush1.bf16.msra.mxu0 0
        %360 = vmatprep.subr.bf16.mxu0 0
        %361 = vmatpush1.bf16.msra.mxu0 0
        %362 = vmatprep.subr.bf16.mxu0 0
        %363 = vmatpush1.bf16.msra.mxu0 0
        %364 = vmatprep.subr.bf16.mxu0 0
        %365 = vmatpush1.bf16.msra.mxu0 0
        %366 = vmatprep.subr.bf16.mxu0 0
        %367 = vmatpush1.bf16.msra.mxu0 0
        %368 = vmatprep.subr.bf16.mxu0 0
        %369 = vmatpush1.bf16.msra.mxu0 0
        %370 = vmatprep.subr.bf16.mxu0 0
        %371 = vmatpush1.bf16.msra.mxu0 0
        %372 = vmatprep.subr.bf16.mxu0 0
        %373 = vmatpush1.bf16.msra.mxu0 0
        %374 = vmatprep.subr.bf16.mxu0 0
        %375 = vmatpush1.bf16.msra.mxu0 0
        %376 = vmatprep.subr.bf16.mxu0 0
        %377 = vmatpush1.bf16.msra.mxu0 0
        %378 = vmatprep.subr.bf16.mxu0 0
        %379 = vmatpush1.bf16.msra.mxu0 0
        %380 = vmatprep.subr.bf16.mxu0 0
        %381 = vmatpush1.bf16.msra.mxu0 0
        %382 = vmatprep.subr.bf16.mxu0 0
        %383 = vmatpush1.bf16.msra.mxu0 0
        %384 = vmatprep.mubr.bf16.mxu0 0
        %385 = vmatmul.mubr.bf16.gmra.mrb[0].mxu0 %v347
        %v386 = vpop.f32.mrb[0].mxu0
        %v387 = vadd.f32 %v318, %v386
        %v388 = vpop.f32.mrb[0].mxu0
        %v389 = vpop.f32.mrb[0].mxu0
        %v390 = vadd.f32 %v323, %v389
        %v391 = vpop.f32.mrb[0].mxu0
        %392 = vmatprep.mubr.bf16.mxu0 0
        %393 = vmatmul.mubr.bf16.gmra.mrb[0].mxu0 %v350
        %v394 = vpop.f32.mrb[0].mxu0
        %v395 = vadd.f32 %v328, %v394
        %v396 = vpop.f32.mrb[0].mxu0
        %v397 = vpop.f32.mrb[0].mxu0
        %v398 = vadd.f32 %v333, %v397
        %v399 = vpop.f32.mrb[0].mxu0
        %400 = vdwg.mxu0
        %v401 = vmax.f32 %v387, 0.0
        %v402 = vmax.f32 %v390, 0.0
        %v403 = vmax.f32 %v395, 0.0
        %v404 = vmax.f32 %v398, 0.0
        %405 = vst [vmem:[%s299] sm:$0xff] %v401
        %406 = vst [vmem:[%s299 + $0x8] sm:$0xff] %v402
        %407 = vst [vmem:[%s299 + $0x10] sm:$0xff] %v403
        %408 = vst [vmem:[%s299 + $0x18] sm:$0xff] %v404
        %v409 = vld [vmem:[%s3] sm:$0xf]
        %v410 = vpack.c.bf16 %v402, %v401
        %v411 = vpack.c.bf16 %v404, %v403
        %v412 = vld [vmem:[%s4] sm:$0xff]
        %414 = vset.pattern.permute.xlu0 0
        %415 = vperm.xlu0 %414, %v412
        %v416 = vpop.permute.xlu0 %415
        %v419 = vsel %vm345, %v409, 0
        %421 = vmatprep.subr.bf16.mxu0 0
        %422 = vmatpush1.bf16.msra.mxu0 %v410
        %423 = vmatprep.subr.bf16.mxu0 0
        %424 = vmatpush1.bf16.msra.mxu0 %v411
        %425 = vmatprep.subr.bf16.mxu0 0
        %426 = vmatpush1.bf16.msra.mxu0 0
        %427 = vmatprep.subr.bf16.mxu0 0
        %428 = vmatpush1.bf16.msra.mxu0 0
        %429 = vmatprep.subr.bf16.mxu0 0
        %430 = vmatpush1.bf16.msra.mxu0 0
        %431 = vmatprep.subr.bf16.mxu0 0
        %432 = vmatpush1.bf16.msra.mxu0 0
        %433 = vmatprep.subr.bf16.mxu0 0
        %434 = vmatpush1.bf16.msra.mxu0 0
        %435 = vmatprep.subr.bf16.mxu0 0
        %436 = vmatpush1.bf16.msra.mxu0 0
        %437 = vmatprep.subr.bf16.mxu0 0
        %438 = vmatpush1.bf16.msra.mxu0 0
        %439 = vmatprep.subr.bf16.mxu0 0
        %440 = vmatpush1.bf16.msra.mxu0 0
        %441 = vmatprep.subr.bf16.mxu0 0
        %442 = vmatpush1.bf16.msra.mxu0 0
        %443 = vmatprep.subr.bf16.mxu0 0
        %444 = vmatpush1.bf16.msra.mxu0 0
        %445 = vmatprep.subr.bf16.mxu0 0
        %446 = vmatpush1.bf16.msra.mxu0 0
        %447 = vmatprep.subr.bf16.mxu0 0
        %448 = vmatpush1.bf16.msra.mxu0 0
        %449 = vmatprep.subr.bf16.mxu0 0
        %450 = vmatpush1.bf16.msra.mxu0 0
        %451 = vmatprep.subr.bf16.mxu0 0
        %452 = vmatpush1.bf16.msra.mxu0 0
        %453 = vmatprep.mubr.bf16.mxu0 0
        %454 = vmatmul.mubr.bf16.gmra.mrb[0].mxu0 %v419
        %v455 = vpop.f32.mrb[0].mxu0
        %v456 = vadd.f32 %v416, %v455
        %v457 = vpop.f32.mrb[0].mxu0
        %v458 = vpop.f32.mrb[0].mxu0
        %v459 = vpop.f32.mrb[0].mxu0
        %460 = vdwg.mxu0
        %461 = vst [vmem:[%s292] sm:$0xff] %v456
        %s462 = sand.u32 %s161, 1
        %s463 = scalar_lea.sflag [#allocation4], %s462
        %s464 = sand.u32 %s161, 1
        %s465 = smul.addr %s464, 8
        %s466 = scalar_lea.vmem [#allocation5], %s465
        %s467 = sand.u32 %s189, 1
        %s468 = scalar_lea.sflag [#allocation7], %s467
        %s469 = sand.u32 %s189, 1
        %s470 = smul.addr %s469, 32
        %s471 = scalar_lea.vmem [#allocation6], %s470
        // Predicated region
        $region45: #{tpu_custom_call.1} parent=39 // pred_check
          %p472 = pneg %p171
        $region46: #{tpu_custom_call.1} parent=39 // pred_check_branch
          %474 = sbr.rel (%p472) target = $region48
        $region47: #{tpu_custom_call.1} parent=39 // pred_region
          %s476 = ssub.s32 128, 128
          %477 = vsyncadd %s463, %s476
          %s478 = sadd.s32 %s32, %s31
          %s479 = smul.addr %s478, 128
          %s480 = scalar_lea.hbm %s5, %s479
          %s482 = sshll.u32 %s466, 4
          %s483 = int_to_ptr.vmem [resolvable:$true] %s482
          %485 = dma.vmem_to_hbm [thread:$0]  %s483, 128, %s480, %s463
        $region48: #{tpu_custom_call.1} parent=39 // pred_fallthru
          _
        // Predicated region
        $region49: #{tpu_custom_call.1} parent=39 // pred_check
          %p486 = pneg %p199
        $region50: #{tpu_custom_call.1} parent=39 // pred_check_branch
          %488 = sbr.rel (%p486) target = $region52
        $region51: #{tpu_custom_call.1} parent=39 // pred_region
          %s490 = ssub.s32 512, 512
          %491 = vsyncadd %s468, %s490
          %s492 = smul.addr %s31, 4
          %s493 = sadd.s32 %s32, %s492
          %s494 = smul.addr %s493, 128
          %s495 = scalar_lea.hbm %s6, %s494
          %s496 = sshll.u32 %s471, 4
          %s497 = int_to_ptr.vmem [resolvable:$true] %s496
          %502 = dma.vmem_to_hbm [thread:$0]  %s497, 512, %s495, %s468, 128, 128, 8
        $region52: #{tpu_custom_call.1} parent=39 // pred_fallthru
          _
      $region40: #{tpu_custom_call.1} parent=5 // pred_fallthru
        _
      %p503 = scmp.le.s32.totalorder 2, %s22
      // Predicated region
      $region53: #{tpu_custom_call.1} parent=5 // pred_check
        %p504 = pneg %p503
      $region54: #{tpu_custom_call.1} parent=5 // pred_check_branch
        %506 = sbr.rel (%p504) target = $region56
      $region55: #{tpu_custom_call.1} parent=5 // pred_region
        %s507 = ssub.s32 %s22, 2
        // Predicated region
        $region57: #{tpu_custom_call.1} parent=55 // pred_check
          %p508 = pneg %p177
        $region58: #{tpu_custom_call.1} parent=55 // pred_check_branch
          %510 = sbr.rel (%p508) target = $region60
        $region59: #{tpu_custom_call.1} parent=55 // pred_region
          %s511 = sand.u32 %s162, 1
          %s512 = scalar_lea.sflag [#allocation4], %s511
          %s513 = sand.u32 %s162, 1
          %s514 = smul.addr %s513, 8
          %s515 = scalar_lea.vmem [#allocation5], %s514
          %516 = dma.done %s512, 128
        $region60: #{tpu_custom_call.1} parent=55 // pred_fallthru
          _
        // Predicated region
        $region61: #{tpu_custom_call.1} parent=55 // pred_check
          %p517 = pneg %p205
        $region62: #{tpu_custom_call.1} parent=55 // pred_check_branch
          %519 = sbr.rel (%p517) target = $region64
        $region63: #{tpu_custom_call.1} parent=55 // pred_region
          %s520 = sand.u32 %s190, 1
          %s521 = scalar_lea.sflag [#allocation7], %s520
          %s522 = sand.u32 %s190, 1
          %s523 = smul.addr %s522, 32
          %s524 = scalar_lea.vmem [#allocation6], %s523
          %525 = dma.done %s521, 512
        $region64: #{tpu_custom_call.1} parent=55 // pred_fallthru
          _
      $region56: #{tpu_custom_call.1} parent=5 // pred_fallthru
        _
    $region6: #{tpu_custom_call.1} parent=1 // loop_footer
      %s26 = sadd.s32 1, %s22
    $region7: #{tpu_custom_call.1} parent=1 // loop_footer_branch
      %21 = sbr.rel target = $region3
    $region8: #{tpu_custom_call.1} parent=1 // loop_exit
      _
    %526 = vsyncpa [#allocation3], 1
    %s527 = scalar_lea.sflag [#allocation3], 1
    %528 = vsyncpa %s527, 1
    %529 = vsyncpa [#allocation4], 1
    %s530 = scalar_lea.sflag [#allocation4], 1
    %531 = vsyncpa %s530, 1
    %532 = vsyncpa [#allocation7], 1
    %s533 = scalar_lea.sflag [#allocation7], 1
    %534 = vsyncpa %s533, 1

</llo_original>
